<compile_context>
chip_gen: v7x
topology: tpu7x:2x2x1
jax: 0.10.0
libtpu: 0.0.40
codegen_flags: <defaults>
</compile_context>

<pallas_src>
import functools

import jax
import jax.numpy as jnp
from jax.experimental import pallas as pl
from jax.experimental.pallas import tpu as pltpu

LANE = 128  # TPU lane width (last dim)


def _round_up(n, m):
    return ((n + m - 1) // m) * m


def _fused_mlp_kernel(n_layers, *refs):
    """refs = (x_ref, w1_ref, b1_ref, ..., wN_ref, bN_ref, o_ref).

    Weights are bf16 in (in, out) layout with hidden dims padded to 128 lanes;
    biases are f32.  The input/output refs carry the logical (unpadded)
    shapes, so the wrapper does no pad/slice HBM round trips.
    """
    x_ref = refs[0]
    o_ref = refs[-1]
    h = x_ref[...].astype(jnp.bfloat16)  # bf16 MXU path for every layer
    for l in range(n_layers):
        w_ref = refs[1 + 2 * l]  # (in_p, out_p) bf16
        b_ref = refs[2 + 2 * l]  # (1, out_p)   f32
        acc = jnp.dot(h, w_ref[...], preferred_element_type=jnp.float32) + b_ref[...]
        # Cast the running activation back to bf16 between layers; keep the
        # final layer's result in f32 for the output store.
        h = acc.astype(jnp.bfloat16) if l + 1 < n_layers else acc
    o_ref[...] = h.astype(o_ref.dtype)


def init_mlp_params(key, input_size, hidden_layer_config, output_size):
    """PyTorch nn.Linear-style uniform(-1/sqrt(fan_in), 1/sqrt(fan_in)) init.

    Returns params in PyTorch layout: w of shape (out, in), b of shape (out,), f32.
    """
    params = []
    sizes = [input_size] + list(hidden_layer_config) + [output_size]
    for fan_in, fan_out in zip(sizes[:-1], sizes[1:]):
        key, kw, kb = jax.random.split(key, 3)
        bound = 1.0 / jnp.sqrt(fan_in)
        w = jax.random.uniform(kw, (fan_out, fan_in), jnp.float32, -bound, bound)
        b = jax.random.uniform(kb, (fan_out,), jnp.float32, -bound, bound)
        params.append((w, b))
    return params


def prepare_params(params):
    """One-time setup: transpose weights to (in, out), cast to bf16, and
    zero-pad only the HIDDEN feature dims to multiples of 128 lanes.

    The first layer's input dim and the last layer's output dim stay logical,
    so x and the output need no wrapper-side pad/slice.  Zero padding is exact
    for the Linear chain (padded lanes carry exact zeros through every layer).
    Biases stay f32.
    """
    n = len(params)
    padded = []
    for i, (w, b) in enumerate(params):
        out_f, in_f = w.shape
        in_p = in_f if i == 0 else _round_up(in_f, LANE)
        out_p = out_f if i == n - 1 else _round_up(out_f, LANE)
        w_t = (
            jnp.zeros((in_p, out_p), jnp.bfloat16)
            .at[:in_f, :out_f]
            .set(w.T.astype(jnp.bfloat16))
        )
        b_p = jnp.zeros((1, out_p), jnp.float32).at[0, :out_f].set(b)
        padded.append((w_t, b_p))
    return padded


@functools.partial(jax.jit, static_argnames=("logical_sizes", "batch_tile"))
def mlp_forward_fused(x, padded_params, *, logical_sizes, batch_tile=256):
    """Fused y = Linear_k(...Linear_1(x)...), matching MLP.forward (no activation).

    logical_sizes: (input_size, *hidden_layer_config, output_size) — used only
    for the advisory CostEstimate (unpadded flops/bytes).
    """
    B, in_f = x.shape
    n_layers = len(padded_params)
    output_size = logical_sizes[-1]

    flat = []
    for w_t, b_p in padded_params:
        flat.extend((w_t, b_p))

    # Advisory cost estimate from LOGICAL (unpadded) shapes.
    flops = 2 * B * sum(a * b for a, b in zip(logical_sizes[:-1], logical_sizes[1:]))
    bytes_accessed = (
        x.size * x.dtype.itemsize
        + sum(a.size * a.dtype.itemsize for a in flat)
        + B * output_size * jnp.dtype(jnp.float32).itemsize
    )
    cost = pl.CostEstimate(flops=flops, transcendentals=0, bytes_accessed=bytes_accessed)

    kernel = functools.partial(_fused_mlp_kernel, n_layers)
    out_shape = jax.ShapeDtypeStruct((B, output_size), jnp.float32)

    use_grid = (B % batch_tile == 0) and (B // batch_tile >= 2)

    if not use_grid:
        # Tiny-batch path: single invocation, everything whole-array in VMEM.
        vmem = pl.BlockSpec(memory_space=pltpu.MemorySpace.VMEM)
        return pl.pallas_call(
            kernel,
            out_shape=out_shape,
            in_specs=[vmem] * (1 + 2 * n_layers),
            out_specs=vmem,
            cost_estimate=cost,
        )(x, *flat)

    # Batch-tiled path: parallel batch grid (uses both TCs on v7x, pipelines
    # activation DMAs).  Weights/biases use constant-index full-array specs so
    # they are fetched once and stay resident in VMEM across grid steps.
    in_specs = [pl.BlockSpec((batch_tile, in_f), lambda i: (i, 0))]
    for w_t, b_p in padded_params:
        in_specs.append(pl.BlockSpec(w_t.shape, lambda i: (0, 0)))
        in_specs.append(pl.BlockSpec(b_p.shape, lambda i: (0, 0)))
    out_specs = pl.BlockSpec((batch_tile, output_size), lambda i: (i, 0))

    return pl.pallas_call(
        kernel,
        out_shape=out_shape,
        grid=(B // batch_tile,),
        in_specs=in_specs,
        out_specs=out_specs,
        compiler_params=pltpu.CompilerParams(dimension_semantics=("parallel",)),
        cost_estimate=cost,
    )(x, *flat)


def mlp_forward_ref_f32(x, params):
    """Pure-JAX f32 reference matching MLP.forward (sequential Linear layers)."""
    for w, b in params:
        x = x @ w.T + b
    return x


def mlp_forward_ref_bf16(x, params):
    """Pure-JAX reference emulating the kernel's numerics:
    bf16 weights/activations, f32 accumulation, f32 bias/output."""
    h = x.astype(jnp.bfloat16)
    n = len(params)
    for i, (w, b) in enumerate(params):
        acc = jnp.dot(h, w.T.astype(jnp.bfloat16), preferred_element_type=jnp.float32) + b
        h = acc.astype(jnp.bfloat16) if i + 1 < n else acc
    return h


if __name__ == "__main__":
    key = jax.random.PRNGKey(0)
    input_size = 32
    hidden_layer_config = [64, 32]
    output_size = 10
    logical_sizes = (input_size, *hidden_layer_config, output_size)

    key, kparams = jax.random.split(key)
    params = init_mlp_params(kparams, input_size, hidden_layer_config, output_size)
    padded_params = prepare_params(params)  # one-time transpose + bf16 + lane padding

    # --- small batch: grid-free whole-array path ---
    key, kx = jax.random.split(key)
    x_small = jax.random.normal(kx, (8, input_size), dtype=jnp.float32)
    logits = mlp_forward_fused(x_small, padded_params, logical_sizes=logical_sizes)
    jax.block_until_ready(logits)
    assert logits.shape == (8, output_size)
    assert jnp.allclose(logits, mlp_forward_ref_bf16(x_small, params), atol=1e-3, rtol=1e-3)
    assert jnp.allclose(logits, mlp_forward_ref_f32(x_small, params), atol=5e-2, rtol=5e-2)

    # --- larger batch: batch-tiled parallel-grid path ---
    key, kx2 = jax.random.split(key)
    x_big = jax.random.normal(kx2, (512, input_size), dtype=jnp.float32)
    logits_big = mlp_forward_fused(
        x_big, padded_params, logical_sizes=logical_sizes, batch_tile=256
    )
    jax.block_until_ready(logits_big)
    assert logits_big.shape == (512, output_size)
    assert jnp.allclose(logits_big, mlp_forward_ref_bf16(x_big, params), atol=1e-3, rtol=1e-3)

    # TODO(synk): loss_function / predict / train_step (CrossEntropyLoss, Softmax,
    # Adam optimizer) are training/inference-head utilities, not part of forward();
    # omitted from the kernel.
    print("KERNEL_OK")
</pallas_src>

<mosaic_0001>
module attributes {stable_mosaic.version = 11 : i64} {
  func.func @_fused_mlp_kernel(%arg0: memref<8x32xf32, #tpu.memory_space<vmem>>, %arg1: memref<32x128xbf16, #tpu.memory_space<vmem>>, %arg2: memref<1x128xf32, #tpu.memory_space<vmem>>, %arg3: memref<128x128xbf16, #tpu.memory_space<vmem>>, %arg4: memref<1x128xf32, #tpu.memory_space<vmem>>, %arg5: memref<128x10xbf16, #tpu.memory_space<vmem>>, %arg6: memref<1x10xf32, #tpu.memory_space<vmem>>, %arg7: memref<8x10xf32, #tpu.memory_space<vmem>>) attributes {dimension_semantics = [], scalar_prefetch = 0 : i64, scratch_operands = 0 : i64, tpu.core_type = #tpu.core_type<tc>} {
    %c0 = arith.constant 0 : index
    %c0_0 = arith.constant 0 : index
    %0 = vector.load %arg0[%c0, %c0_0] : memref<8x32xf32, #tpu.memory_space<vmem>>, vector<8x32xf32>
    %1 = arith.truncf %0 : vector<8x32xf32> to vector<8x32xbf16>
    %c0_1 = arith.constant 0 : index
    %c0_2 = arith.constant 0 : index
    %2 = vector.load %arg1[%c0_1, %c0_2] : memref<32x128xbf16, #tpu.memory_space<vmem>>, vector<32x128xbf16>
    %cst = arith.constant dense<0.000000e+00> : vector<8x128xf32>
    %3 = tpu.matmul %1, %2, %cst {dimension_numbers = #tpu.dot_dimension_numbers<[1], [0], [0], [1], [0, 0, 1, 1], [], []>} : vector<8x32xbf16>, vector<32x128xbf16>, vector<8x128xf32> -> vector<8x128xf32>
    %c0_3 = arith.constant 0 : index
    %c0_4 = arith.constant 0 : index
    %4 = vector.load %arg2[%c0_3, %c0_4] : memref<1x128xf32, #tpu.memory_space<vmem>>, vector<1x128xf32>
    %5 = vector.broadcast %4 : vector<1x128xf32> to vector<8x128xf32>
    %6 = arith.addf %3, %5 : vector<8x128xf32>
    %7 = arith.truncf %6 : vector<8x128xf32> to vector<8x128xbf16>
    %c0_5 = arith.constant 0 : index
    %c0_6 = arith.constant 0 : index
    %8 = vector.load %arg3[%c0_5, %c0_6] : memref<128x128xbf16, #tpu.memory_space<vmem>>, vector<128x128xbf16>
    %cst_7 = arith.constant dense<0.000000e+00> : vector<8x128xf32>
    %9 = tpu.matmul %7, %8, %cst_7 {dimension_numbers = #tpu.dot_dimension_numbers<[1], [0], [0], [1], [0, 0, 1, 1], [], []>} : vector<8x128xbf16>, vector<128x128xbf16>, vector<8x128xf32> -> vector<8x128xf32>
    %c0_8 = arith.constant 0 : index
    %c0_9 = arith.constant 0 : index
    %10 = vector.load %arg4[%c0_8, %c0_9] : memref<1x128xf32, #tpu.memory_space<vmem>>, vector<1x128xf32>
    %11 = vector.broadcast %10 : vector<1x128xf32> to vector<8x128xf32>
    %12 = arith.addf %9, %11 : vector<8x128xf32>
    %13 = arith.truncf %12 : vector<8x128xf32> to vector<8x128xbf16>
    %c0_10 = arith.constant 0 : index
    %c0_11 = arith.constant 0 : index
    %14 = vector.load %arg5[%c0_10, %c0_11] : memref<128x10xbf16, #tpu.memory_space<vmem>>, vector<128x10xbf16>
    %cst_12 = arith.constant dense<0.000000e+00> : vector<8x10xf32>
    %15 = tpu.matmul %13, %14, %cst_12 {dimension_numbers = #tpu.dot_dimension_numbers<[1], [0], [0], [1], [0, 0, 1, 1], [], []>} : vector<8x128xbf16>, vector<128x10xbf16>, vector<8x10xf32> -> vector<8x10xf32>
    %c0_13 = arith.constant 0 : index
    %c0_14 = arith.constant 0 : index
    %16 = vector.load %arg6[%c0_13, %c0_14] : memref<1x10xf32, #tpu.memory_space<vmem>>, vector<1x10xf32>
    %17 = vector.broadcast %16 : vector<1x10xf32> to vector<8x10xf32>
    %18 = arith.addf %15, %17 : vector<8x10xf32>
    %c0_15 = arith.constant 0 : index
    %c0_16 = arith.constant 0 : index
    %19 = vector.load %arg7[%c0_15, %c0_16] : memref<8x10xf32, #tpu.memory_space<vmem>>, vector<8x10xf32>
    tpu.vector_store %arg7[%c0_15, %c0_16], %18 {strides = array<i32>} : memref<8x10xf32, #tpu.memory_space<vmem>>, vector<8x10xf32>,
    return
  }
}

</mosaic_0001>

<llo_original>
// kernel: mlp_forward_fused.1
$region0: #{mlp_forward_fused.1}
  #allocation0 [shape = 'u32[]', space=smem, size = 0x4, offset = 0x4, fixed_abs, tag = 'smem constant byte address 0x4 - core index']
  #allocation1 [shape = 'u32[144,128]{1,0:T(1,128)}', space=vmem, size = 0x12000, scoped, tag = 'internal scratch']
  %s0 = inlined_call_operand.hbm [shape: f32[8,32], index: 0, kind: input, shape index: {}]
  %s1 = inlined_call_operand.vmem [shape: bf16[32,128], index: 1, kind: input, shape index: {}]
  %s2 = inlined_call_operand.vmem [shape: f32[1,128], index: 2, kind: input, shape index: {}]
  %s3 = inlined_call_operand.vmem [shape: bf16[128,128], index: 3, kind: input, shape index: {}]
  %s4 = inlined_call_operand.vmem [shape: f32[1,128], index: 4, kind: input, shape index: {}]
  %s5 = inlined_call_operand.vmem [shape: bf16[128,10], index: 5, kind: input, shape index: {}]
  %s6 = inlined_call_operand.vmem [shape: f32[1,10], index: 6, kind: input, shape index: {}]
  %s7 = inlined_call_operand.hbm [shape: f32[8,10], index: 7, kind: output, shape index: {}]
  %s8 = sld [smem:[#allocation0]]
  $region42: #{mlp_forward_fused.1} parent=0
    _
  %s10 = ssub.s32 1, %s8
  %s11 = scalar_select 0, %s10, %s8
  $region1: #{mlp_forward_fused.1} parent=0
    #allocation2 [shape = 'u8[4096]{0}', space=vmem, size = 0x1000, scoped, tag = 'input window, operand 0, single buffered']
    #allocation3 [shape = 's32[1]{0}', space=sflag, size = 0x4, scoped, tag = 'scoped memory for mlp_forward_fused.1']
    #allocation4 [shape = 's32[1]{0}', space=sflag, size = 0x4, scoped, tag = 'scoped memory for mlp_forward_fused.1']
    #allocation5 [shape = 'u8[4096]{0}', space=vmem, size = 0x1000, scoped, tag = 'output window, operand 0, single buffered']
    %12 = vsyncpa [#allocation3], 0
    %13 = vsyncpa [#allocation4], 0
    // Predicated region
    $region2: #{mlp_forward_fused.1} parent=1 // pred_check
      _
    $region3: #{mlp_forward_fused.1} parent=1 // pred_check_branch
      %15 = sbr.rel (0) target = $region5
    $region4: #{mlp_forward_fused.1} parent=1 // pred_region
      %s17 = ssub.s32 128, 128
      %18 = vsyncadd [#allocation3], %s17
      %s20 = sshll.u32 [#allocation2], 4
      %s21 = int_to_ptr.vmem [resolvable:$true] %s20
      %23 = dma.hbm_to_vmem [thread:$0]  %s0, 128, %s21, [#allocation3]
    $region5: #{mlp_forward_fused.1} parent=1 // pred_fallthru
      _
    // Predicated region
    $region6: #{mlp_forward_fused.1} parent=1 // pred_check
      _
    $region7: #{mlp_forward_fused.1} parent=1 // pred_check_branch
      %25 = sbr.rel (0) target = $region9
    $region8: #{mlp_forward_fused.1} parent=1 // pred_region
      _
    $region9: #{mlp_forward_fused.1} parent=1 // pred_fallthru
      _
    // Predicated region
    $region10: #{mlp_forward_fused.1} parent=1 // pred_check
      _
    $region11: #{mlp_forward_fused.1} parent=1 // pred_check_branch
      %27 = sbr.rel (0) target = $region13
    $region12: #{mlp_forward_fused.1} parent=1 // pred_region
      _
    $region13: #{mlp_forward_fused.1} parent=1 // pred_fallthru
      _
    // Predicated region
    $region14: #{mlp_forward_fused.1} parent=1 // pred_check
      _
    $region15: #{mlp_forward_fused.1} parent=1 // pred_check_branch
      %29 = sbr.rel (0) target = $region17
    $region16: #{mlp_forward_fused.1} parent=1 // pred_region
      _
    $region17: #{mlp_forward_fused.1} parent=1 // pred_fallthru
      _
    // Predicated region
    $region18: #{mlp_forward_fused.1} parent=1 // pred_check
      _
    $region19: #{mlp_forward_fused.1} parent=1 // pred_check_branch
      %31 = sbr.rel (0) target = $region21
    $region20: #{mlp_forward_fused.1} parent=1 // pred_region
      _
    $region21: #{mlp_forward_fused.1} parent=1 // pred_fallthru
      _
    // Predicated region
    $region22: #{mlp_forward_fused.1} parent=1 // pred_check
      _
    $region23: #{mlp_forward_fused.1} parent=1 // pred_check_branch
      %33 = sbr.rel (0) target = $region25
    $region24: #{mlp_forward_fused.1} parent=1 // pred_region
      _
    $region25: #{mlp_forward_fused.1} parent=1 // pred_fallthru
      _
    // Predicated region
    $region26: #{mlp_forward_fused.1} parent=1 // pred_check
      _
    $region27: #{mlp_forward_fused.1} parent=1 // pred_check_branch
      %35 = sbr.rel (0) target = $region29
    $region28: #{mlp_forward_fused.1} parent=1 // pred_region
      _
    $region29: #{mlp_forward_fused.1} parent=1 // pred_fallthru
      _
    // Predicated region
    $region30: #{mlp_forward_fused.1} parent=1 // pred_check
      _
    $region31: #{mlp_forward_fused.1} parent=1 // pred_check_branch
      %37 = sbr.rel (0) target = $region33
    $region32: #{mlp_forward_fused.1} parent=1 // pred_region
      %38 = dma.done [#allocation3], 128
    $region33: #{mlp_forward_fused.1} parent=1 // pred_fallthru
      _
    %v40 = vld [vmem:[#allocation2] sm:$0xff]
    %v41 = vpack.c.bf16 %v40, %v40
    %v42 = vld [vmem:[%s1] sm:$0xf]
    %v43 = vld [vmem:[%s1 + $0x4] sm:$0xf]
    %v44 = vld [vmem:[%s1 + $0x8] sm:$0xf]
    %v45 = vld [vmem:[%s1 + $0xc] sm:$0xf]
    %v46 = vld [vmem:[%s2] sm:$0x1]
    %v48 = vlaneseq
    %v49 = vshrl.u32 %v48, 7
    %v50 = vsub.s32 0, %v49
    %v51 = vrot.slane %v46, %v50
    %v57 = vunpack.c.l.b16 %v42
    %v58 = vunpack.c.l.b16 %v43
    %v59 = vunpack.c.l.b16 %v44
    %v60 = vunpack.c.l.b16 %v45
    %v61 = vpack.c.b16 %v58, %v57
    %v62 = vpack.c.b16 %v60, %v59
    %vm65 = vcmask 261120
    %v67 = vsel %vm65, %v41, 0
    %69 = vmatprep.subr.bf16.mxu0 0
    %70 = vmatpush1.bf16.msra.mxu0 %v61
    %71 = vmatprep.subr.bf16.mxu0 0
    %72 = vmatpush1.bf16.msra.mxu0 %v62
    %73 = vmatprep.subr.bf16.mxu0 0
    %74 = vmatpush1.bf16.msra.mxu0 0
    %75 = vmatprep.subr.bf16.mxu0 0
    %76 = vmatpush1.bf16.msra.mxu0 0
    %77 = vmatprep.subr.bf16.mxu0 0
    %78 = vmatpush1.bf16.msra.mxu0 0
    %79 = vmatprep.subr.bf16.mxu0 0
    %80 = vmatpush1.bf16.msra.mxu0 0
    %81 = vmatprep.subr.bf16.mxu0 0
    %82 = vmatpush1.bf16.msra.mxu0 0
    %83 = vmatprep.subr.bf16.mxu0 0
    %84 = vmatpush1.bf16.msra.mxu0 0
    %85 = vmatprep.subr.bf16.mxu0 0
    %86 = vmatpush1.bf16.msra.mxu0 0
    %87 = vmatprep.subr.bf16.mxu0 0
    %88 = vmatpush1.bf16.msra.mxu0 0
    %89 = vmatprep.subr.bf16.mxu0 0
    %90 = vmatpush1.bf16.msra.mxu0 0
    %91 = vmatprep.subr.bf16.mxu0 0
    %92 = vmatpush1.bf16.msra.mxu0 0
    %93 = vmatprep.subr.bf16.mxu0 0
    %94 = vmatpush1.bf16.msra.mxu0 0
    %95 = vmatprep.subr.bf16.mxu0 0
    %96 = vmatpush1.bf16.msra.mxu0 0
    %97 = vmatprep.subr.bf16.mxu0 0
    %98 = vmatpush1.bf16.msra.mxu0 0
    %99 = vmatprep.subr.bf16.mxu0 0
    %100 = vmatpush1.bf16.msra.mxu0 0
    %101 = vmatprep.mubr.bf16.mxu0 0
    %102 = vmatmul.mubr.bf16.gmra.mrb[0].mxu0 %v67
    %v103 = vpop.f32.mrb[0].mxu0
    %v104 = vadd.f32 %v51, %v103
    %v105 = vpop.f32.mrb[0].mxu0
    %v106 = vpop.f32.mrb[0].mxu0
    %v107 = vpop.f32.mrb[0].mxu0
    %108 = vdwg.mxu0
    %v109 = vpack.c.bf16 %v104, %v104
    %v110 = vld [vmem:[%s3] sm:$0xf]
    %v111 = vld [vmem:[%s3 + $0x4] sm:$0xf]
    %v112 = vld [vmem:[%s3 + $0x8] sm:$0xf]
    %v113 = vld [vmem:[%s3 + $0xc] sm:$0xf]
    %v114 = vld [vmem:[%s3 + $0x10] sm:$0xf]
    %v115 = vld [vmem:[%s3 + $0x14] sm:$0xf]
    %v116 = vld [vmem:[%s3 + $0x18] sm:$0xf]
    %v117 = vld [vmem:[%s3 + $0x1c] sm:$0xf]
    %v118 = vld [vmem:[%s3 + $0x20] sm:$0xf]
    %v119 = vld [vmem:[%s3 + $0x24] sm:$0xf]
    %v120 = vld [vmem:[%s3 + $0x28] sm:$0xf]
    %v121 = vld [vmem:[%s3 + $0x2c] sm:$0xf]
    %v122 = vld [vmem:[%s3 + $0x30] sm:$0xf]
    %v123 = vld [vmem:[%s3 + $0x34] sm:$0xf]
    %v124 = vld [vmem:[%s3 + $0x38] sm:$0xf]
    %v125 = vld [vmem:[%s3 + $0x3c] sm:$0xf]
    %v126 = vld [vmem:[%s4] sm:$0x1]
    %v128 = vlaneseq
    %v129 = vshrl.u32 %v128, 7
    %v130 = vsub.s32 0, %v129
    %v131 = vrot.slane %v126, %v130
    %v149 = vunpack.c.l.b16 %v110
    %v150 = vunpack.c.l.b16 %v111
    %v151 = vunpack.c.l.b16 %v112
    %v152 = vunpack.c.l.b16 %v113
    %v153 = vunpack.c.l.b16 %v114
    %v154 = vunpack.c.l.b16 %v115
    %v155 = vunpack.c.l.b16 %v116
    %v156 = vunpack.c.l.b16 %v117
    %v157 = vunpack.c.l.b16 %v118
    %v158 = vunpack.c.l.b16 %v119
    %v159 = vunpack.c.l.b16 %v120
    %v160 = vunpack.c.l.b16 %v121
    %v161 = vunpack.c.l.b16 %v122
    %v162 = vunpack.c.l.b16 %v123
    %v163 = vunpack.c.l.b16 %v124
    %v164 = vunpack.c.l.b16 %v125
    %v165 = vpack.c.b16 %v150, %v149
    %v166 = vpack.c.b16 %v152, %v151
    %v167 = vpack.c.b16 %v154, %v153
    %v168 = vpack.c.b16 %v156, %v155
    %v169 = vpack.c.b16 %v158, %v157
    %v170 = vpack.c.b16 %v160, %v159
    %v171 = vpack.c.b16 %v162, %v161
    %v172 = vpack.c.b16 %v164, %v163
    %181 = vmatprep.subr.bf16.mxu0 0
    %182 = vmatpush1.bf16.msra.mxu0 %v165
    %183 = vmatprep.subr.bf16.mxu0 0
    %184 = vmatpush1.bf16.msra.mxu0 %v166
    %185 = vmatprep.subr.bf16.mxu0 0
    %186 = vmatpush1.bf16.msra.mxu0 %v167
    %187 = vmatprep.subr.bf16.mxu0 0
    %188 = vmatpush1.bf16.msra.mxu0 %v168
    %189 = vmatprep.subr.bf16.mxu0 0
    %190 = vmatpush1.bf16.msra.mxu0 %v169
    %191 = vmatprep.subr.bf16.mxu0 0
    %192 = vmatpush1.bf16.msra.mxu0 %v170
    %193 = vmatprep.subr.bf16.mxu0 0
    %194 = vmatpush1.bf16.msra.mxu0 %v171
    %195 = vmatprep.subr.bf16.mxu0 0
    %196 = vmatpush1.bf16.msra.mxu0 %v172
    %197 = vmatprep.subr.bf16.mxu0 0
    %198 = vmatpush1.bf16.msra.mxu0 0
    %199 = vmatprep.subr.bf16.mxu0 0
    %200 = vmatpush1.bf16.msra.mxu0 0
    %201 = vmatprep.subr.bf16.mxu0 0
    %202 = vmatpush1.bf16.msra.mxu0 0
    %203 = vmatprep.subr.bf16.mxu0 0
    %204 = vmatpush1.bf16.msra.mxu0 0
    %205 = vmatprep.subr.bf16.mxu0 0
    %206 = vmatpush1.bf16.msra.mxu0 0
    %207 = vmatprep.subr.bf16.mxu0 0
    %208 = vmatpush1.bf16.msra.mxu0 0
    %209 = vmatprep.subr.bf16.mxu0 0
    %210 = vmatpush1.bf16.msra.mxu0 0
    %211 = vmatprep.subr.bf16.mxu0 0
    %212 = vmatpush1.bf16.msra.mxu0 0
    %213 = vmatprep.mubr.bf16.mxu0 0
    %214 = vmatmul.mubr.bf16.gmra.mrb[0].mxu0 %v109
    %v215 = vpop.f32.mrb[0].mxu0
    %v216 = vadd.f32 %v131, %v215
    %v217 = vpop.f32.mrb[0].mxu0
    %v218 = vpop.f32.mrb[0].mxu0
    %v219 = vpop.f32.mrb[0].mxu0
    %220 = vdwg.mxu0
    %v221 = vpack.c.bf16 %v216, %v216
    %v222 = vld [vmem:[%s5] sm:$0xf]
    %v223 = vld [vmem:[%s5 + $0x4] sm:$0xf]
    %v224 = vld [vmem:[%s5 + $0x8] sm:$0xf]
    %v225 = vld [vmem:[%s5 + $0xc] sm:$0xf]
    %v226 = vld [vmem:[%s5 + $0x10] sm:$0xf]
    %v227 = vld [vmem:[%s5 + $0x14] sm:$0xf]
    %v228 = vld [vmem:[%s5 + $0x18] sm:$0xf]
    %v229 = vld [vmem:[%s5 + $0x1c] sm:$0xf]
    %v230 = vld [vmem:[%s5 + $0x20] sm:$0xf]
    %v231 = vld [vmem:[%s5 + $0x24] sm:$0xf]
    %v232 = vld [vmem:[%s5 + $0x28] sm:$0xf]
    %v233 = vld [vmem:[%s5 + $0x2c] sm:$0xf]
    %v234 = vld [vmem:[%s5 + $0x30] sm:$0xf]
    %v235 = vld [vmem:[%s5 + $0x34] sm:$0xf]
    %v236 = vld [vmem:[%s5 + $0x38] sm:$0xf]
    %v237 = vld [vmem:[%s5 + $0x3c] sm:$0xf]
    %v238 = vld [vmem:[%s6] sm:$0x1]
    %v240 = vlaneseq
    %v241 = vshrl.u32 %v240, 7
    %v242 = vsub.s32 0, %v241
    %v243 = vrot.slane %v238, %v242
    %v261 = vunpack.c.l.b16 %v222
    %v262 = vunpack.c.l.b16 %v223
    %v263 = vunpack.c.l.b16 %v224
    %v264 = vunpack.c.l.b16 %v225
    %v265 = vunpack.c.l.b16 %v226
    %v266 = vunpack.c.l.b16 %v227
    %v267 = vunpack.c.l.b16 %v228
    %v268 = vunpack.c.l.b16 %v229
    %v269 = vunpack.c.l.b16 %v230
    %v270 = vunpack.c.l.b16 %v231
    %v271 = vunpack.c.l.b16 %v232
    %v272 = vunpack.c.l.b16 %v233
    %v273 = vunpack.c.l.b16 %v234
    %v274 = vunpack.c.l.b16 %v235
    %v275 = vunpack.c.l.b16 %v236
    %v276 = vunpack.c.l.b16 %v237
    %v277 = vpack.c.b16 %v262, %v261
    %v278 = vpack.c.b16 %v264, %v263
    %v279 = vpack.c.b16 %v266, %v265
    %v280 = vpack.c.b16 %v268, %v267
    %v281 = vpack.c.b16 %v270, %v269
    %v282 = vpack.c.b16 %v272, %v271
    %v283 = vpack.c.b16 %v274, %v273
    %v284 = vpack.c.b16 %v276, %v275
    %293 = vmatprep.subr.bf16.mxu0 0
    %294 = vmatpush1.bf16.msra.mxu0 %v277
    %295 = vmatprep.subr.bf16.mxu0 0
    %296 = vmatpush1.bf16.msra.mxu0 %v278
    %297 = vmatprep.subr.bf16.mxu0 0
    %298 = vmatpush1.bf16.msra.mxu0 %v279
    %299 = vmatprep.subr.bf16.mxu0 0
    %300 = vmatpush1.bf16.msra.mxu0 %v280
    %301 = vmatprep.subr.bf16.mxu0 0
    %302 = vmatpush1.bf16.msra.mxu0 %v281
    %303 = vmatprep.subr.bf16.mxu0 0
    %304 = vmatpush1.bf16.msra.mxu0 %v282
    %305 = vmatprep.subr.bf16.mxu0 0
    %306 = vmatpush1.bf16.msra.mxu0 %v283
    %307 = vmatprep.subr.bf16.mxu0 0
    %308 = vmatpush1.bf16.msra.mxu0 %v284
    %309 = vmatprep.subr.bf16.mxu0 0
    %310 = vmatpush1.bf16.msra.mxu0 0
    %311 = vmatprep.subr.bf16.mxu0 0
    %312 = vmatpush1.bf16.msra.mxu0 0
    %313 = vmatprep.subr.bf16.mxu0 0
    %314 = vmatpush1.bf16.msra.mxu0 0
    %315 = vmatprep.subr.bf16.mxu0 0
    %316 = vmatpush1.bf16.msra.mxu0 0
    %317 = vmatprep.subr.bf16.mxu0 0
    %318 = vmatpush1.bf16.msra.mxu0 0
    %319 = vmatprep.subr.bf16.mxu0 0
    %320 = vmatpush1.bf16.msra.mxu0 0
    %321 = vmatprep.subr.bf16.mxu0 0
    %322 = vmatpush1.bf16.msra.mxu0 0
    %323 = vmatprep.subr.bf16.mxu0 0
    %324 = vmatpush1.bf16.msra.mxu0 0
    %325 = vmatprep.mubr.bf16.mxu0 0
    %326 = vmatmul.mubr.bf16.gmra.mrb[0].mxu0 %v221
    %v327 = vpop.f32.mrb[0].mxu0
    %v328 = vadd.f32 %v243, %v327
    %v329 = vpop.f32.mrb[0].mxu0
    %v330 = vpop.f32.mrb[0].mxu0
    %v331 = vpop.f32.mrb[0].mxu0
    %332 = vdwg.mxu0
    %vm333 = vcmask 80896
    %334 = vst.msk [vmem:[#allocation5] sm:$0xff] %vm333, %v328
    // Predicated region
    $region34: #{mlp_forward_fused.1} parent=1 // pred_check
      _
    $region35: #{mlp_forward_fused.1} parent=1 // pred_check_branch
      %336 = sbr.rel (0) target = $region37
    $region36: #{mlp_forward_fused.1} parent=1 // pred_region
      %s338 = ssub.s32 128, 128
      %339 = vsyncadd [#allocation4], %s338
      %s341 = sshll.u32 [#allocation5], 4
      %s342 = int_to_ptr.vmem [resolvable:$true] %s341
      %344 = dma.vmem_to_hbm [thread:$0]  %s342, 128, %s7, [#allocation4]
    $region37: #{mlp_forward_fused.1} parent=1 // pred_fallthru
      _
    // Predicated region
    $region38: #{mlp_forward_fused.1} parent=1 // pred_check
      _
    $region39: #{mlp_forward_fused.1} parent=1 // pred_check_branch
      %346 = sbr.rel (0) target = $region41
    $region40: #{mlp_forward_fused.1} parent=1 // pred_region
      %347 = dma.done [#allocation4], 128
    $region41: #{mlp_forward_fused.1} parent=1 // pred_fallthru
      _
    %348 = vsyncpa [#allocation3], 1
    %349 = vsyncpa [#allocation4], 1

</llo_original>
